<compile_context>
chip_gen: v7x
topology: tpu7x:2x2x1
jax: 0.10.0
libtpu: 0.0.40
codegen_flags: <defaults>
</compile_context>

<pallas_src>
import functools
import math

import jax
import jax.numpy as jnp
from jax.experimental import pallas as pl
from jax.experimental.pallas import tpu as pltpu

NEG_INF = -1e9
LN_EPS = 1e-5
TM_TARGET = 512  # row-tile target for the MLP kernel (multiple of 16 for bf16 packing)


def _pick_tile(dim, target, quantum):
    """Largest tile <= target that divides dim and is a multiple of quantum.
    Falls back to the full extent (block == array dim is always legal)."""
    if dim <= target:
        return dim
    t = (target // quantum) * quantum
    while t >= quantum:
        if dim % t == 0:
            return t
        t -= quantum
    return dim


def _vmem_limit(block_bytes, scratch_bytes=0):
    """Shape-derived VMEM cap: double-buffered pipeline blocks + scratch +
    headroom, clamped to [16 MiB, 48 MiB] (safe on v7x's 64 MiB/core)."""
    ws = 2 * block_bytes + scratch_bytes
    lim = int(ws * 1.5) + (4 << 20)
    return max(16 << 20, min(lim, 48 << 20))


# ----------------------------------------------------------------------------
# Kernels
# ----------------------------------------------------------------------------
def attn_block_kernel(x_ref, wqkv_ref, bqkv_ref, wout_ref, bout_ref, o_ref,
                      ctx_ref, *, num_heads):
    # One batch element per grid step.
    #   x:    (1, S, D) f32 residual stream
    #   wqkv: (D, 3D) bf16  (LN1 affine + 1/sqrt(hd) Q-scale already folded in)
    #   bqkv: (1, 3D) f32
    #   wout: (D, D)  bf16, bout: (1, D) f32
    #   ctx_ref: VMEM scratch (S, D) bf16
    S = x_ref.shape[1]
    D = x_ref.shape[2]
    hd = D // num_heads

    x = x_ref[0].astype(jnp.float32)                                  # (S, D)
    mu = jnp.mean(x, axis=-1, keepdims=True)
    var = jnp.mean(jnp.square(x - mu), axis=-1, keepdims=True)
    xn = (x - mu) * jax.lax.rsqrt(var + LN_EPS)                        # affine folded into wqkv

    qkv = jnp.dot(xn.astype(jnp.bfloat16), wqkv_ref[...],
                  preferred_element_type=jnp.float32) + bqkv_ref[...]  # (S, 3D) f32
    qkv = qkv.astype(jnp.bfloat16)

    qi = jax.lax.broadcasted_iota(jnp.int32, (S, S), 0)
    ki = jax.lax.broadcasted_iota(jnp.int32, (S, S), 1)
    causal = ki > qi

    # TODO(synk): process 128-lane head pairs (with a prep-time column
    # permutation of wqkv) to avoid lane shuffles on hd=64 slices.
    for h in range(num_heads):                                         # static unroll
        qh = qkv[:, h * hd:(h + 1) * hd]                               # (S, hd)
        kh = qkv[:, D + h * hd:D + (h + 1) * hd]
        vh = qkv[:, 2 * D + h * hd:2 * D + (h + 1) * hd]
        s = jax.lax.dot_general(qh, kh, (((1,), (1,)), ((), ())),
                                preferred_element_type=jnp.float32)    # (S, S) f32
        s = jnp.where(causal, NEG_INF, s)
        p = jnp.exp(s - jnp.max(s, axis=-1, keepdims=True))
        ctx_h = jnp.dot(p.astype(jnp.bfloat16), vh,
                        preferred_element_type=jnp.float32)            # (S, hd)
        # deferred softmax normalization on the (S, hd) context, not (S, S) p
        ctx_h = ctx_h * pl.reciprocal(jnp.sum(p, axis=-1, keepdims=True),
                                      approx=True)
        ctx_ref[:, h * hd:(h + 1) * hd] = ctx_h.astype(jnp.bfloat16)

    out = jnp.dot(ctx_ref[...], wout_ref[...],
                  preferred_element_type=jnp.float32) + bout_ref[...]
    o_ref[0] = (out + x).astype(o_ref.dtype)                           # residual add


def mlp_block_kernel(x_ref, wfc_ref, bfc_ref, wproj_ref, bproj_ref, o_ref):
    # Fused LN2 (affine folded) + fc + QuickGELU + proj + residual.
    #   x: (tm, D) f32, wfc: (D, 4D) bf16, bfc: (1, 4D) f32,
    #   wproj: (4D, D) bf16, bproj: (1, D) f32
    x = x_ref[...].astype(jnp.float32)
    mu = jnp.mean(x, axis=-1, keepdims=True)
    var = jnp.mean(jnp.square(x - mu), axis=-1, keepdims=True)
    xn = (x - mu) * jax.lax.rsqrt(var + LN_EPS)
    h = jnp.dot(xn.astype(jnp.bfloat16), wfc_ref[...],
                preferred_element_type=jnp.float32) + bfc_ref[...]     # (tm, 4D) f32
    h = h * jax.nn.sigmoid(1.702 * h)                                  # QuickGELU (f32, EUP)
    y = jnp.dot(h.astype(jnp.bfloat16), wproj_ref[...],
                preferred_element_type=jnp.float32) + bproj_ref[...]
    o_ref[...] = (y + x).astype(o_ref.dtype)                           # residual add


def final_head_kernel(x_ref, w_ref, b_ref, o_ref):
    # Fused final LayerNorm (affine folded into w/b) + text projection on the
    # already-gathered (B, D) EOT rows.
    x = x_ref[...].astype(jnp.float32)
    mu = jnp.mean(x, axis=-1, keepdims=True)
    var = jnp.mean(jnp.square(x - mu), axis=-1, keepdims=True)
    xn = (x - mu) * jax.lax.rsqrt(var + LN_EPS)
    o_ref[...] = (jnp.dot(xn.astype(jnp.bfloat16), w_ref[...],
                          preferred_element_type=jnp.float32)
                  + b_ref[...]).astype(o_ref.dtype)


# ----------------------------------------------------------------------------
# pallas_call wrappers
# ----------------------------------------------------------------------------
def attention_block(x_bsd, wqkv, bqkv, wout, bout, num_heads):
    B, S, D = x_bsd.shape
    block_bytes = (S * D * 4 + wqkv.nbytes + bqkv.nbytes
                   + wout.nbytes + bout.nbytes + S * D * 4)
    scratch_bytes = S * D * 2
    cost = pl.CostEstimate(
        flops=int(B * (2 * S * D * 3 * D + 4 * S * S * D + 2 * S * D * D)),
        transcendentals=int(B * num_heads * S * S),
        bytes_accessed=int(2 * x_bsd.nbytes
                           + B * (wqkv.nbytes + wout.nbytes)))
    return pl.pallas_call(
        functools.partial(attn_block_kernel, num_heads=num_heads),
        out_shape=jax.ShapeDtypeStruct((B, S, D), jnp.float32),
        grid=(B,),
        in_specs=[pl.BlockSpec((1, S, D), lambda b: (b, 0, 0)),
                  pl.BlockSpec(wqkv.shape, lambda b: (0, 0)),
                  pl.BlockSpec(bqkv.shape, lambda b: (0, 0)),
                  pl.BlockSpec(wout.shape, lambda b: (0, 0)),
                  pl.BlockSpec(bout.shape, lambda b: (0, 0))],
        out_specs=pl.BlockSpec((1, S, D), lambda b: (b, 0, 0)),
        scratch_shapes=[pltpu.VMEM((S, D), jnp.bfloat16)],
        compiler_params=pltpu.CompilerParams(
            dimension_semantics=("parallel",),
            vmem_limit_bytes=_vmem_limit(block_bytes, scratch_bytes)),
        cost_estimate=cost,
    )(x_bsd, wqkv, bqkv, wout, bout)


def mlp_block(x, wfc, bfc, wproj, bproj):
    M, D = x.shape
    N4 = wfc.shape[1]
    tm = _pick_tile(M, TM_TARGET, 16)          # quantum 16: bf16 sublane packing
    block_bytes = (tm * D * 4 + wfc.nbytes + bfc.nbytes
                   + wproj.nbytes + bproj.nbytes + tm * D * 4)
    cost = pl.CostEstimate(
        flops=int(4 * M * D * N4 + 12 * M * D),
        transcendentals=int(M * N4),
        bytes_accessed=int(2 * x.nbytes + wfc.nbytes + wproj.nbytes))
    return pl.pallas_call(
        mlp_block_kernel,
        out_shape=jax.ShapeDtypeStruct((M, D), jnp.float32),
        grid=(M // tm,),
        in_specs=[pl.BlockSpec((tm, D), lambda i: (i, 0)),
                  pl.BlockSpec(wfc.shape, lambda i: (0, 0)),
                  pl.BlockSpec(bfc.shape, lambda i: (0, 0)),
                  pl.BlockSpec(wproj.shape, lambda i: (0, 0)),
                  pl.BlockSpec(bproj.shape, lambda i: (0, 0))],
        out_specs=pl.BlockSpec((tm, D), lambda i: (i, 0)),
        compiler_params=pltpu.CompilerParams(
            dimension_semantics=("parallel",),
            vmem_limit_bytes=_vmem_limit(block_bytes)),
        cost_estimate=cost,
    )(x, wfc, bfc, wproj, bproj)


def final_head(x_eot, w, b):
    B, D = x_eot.shape
    E = w.shape[1]
    block_bytes = x_eot.nbytes + w.nbytes + b.nbytes + B * E * 4
    return pl.pallas_call(
        final_head_kernel,
        out_shape=jax.ShapeDtypeStruct((B, E), jnp.float32),
        compiler_params=pltpu.CompilerParams(
            vmem_limit_bytes=_vmem_limit(block_bytes)),
    )(x_eot, w, b)


# ----------------------------------------------------------------------------
# TextEncoder forward
# ----------------------------------------------------------------------------
def text_encoder_forward(prompts, tokenized_prompts, params):
    B, S, D = prompts.shape
    H = params["num_heads"]
    M = B * S

    # x = prompts + positional_embedding (plain JAX elementwise glue)
    x = prompts.astype(jnp.float32) + params["pos"][None].astype(jnp.float32)

    for lyr in params["layers"]:
        # fused attention sub-block (LN1 folded + QKV + attention + out-proj + residual)
        x = attention_block(x, lyr["attn_qkv_w"], lyr["attn_qkv_b"],
                            lyr["attn_out_w"], lyr["attn_out_b"], H)
        # fused MLP sub-block (LN2 folded + fc + QuickGELU + proj + residual)
        x = mlp_block(x.reshape(M, D), lyr["mlp_fc_w"], lyr["mlp_fc_b"],
                      lyr["mlp_proj_w"], lyr["mlp_proj_b"]).reshape(B, S, D)

    # EOT gather first (row-wise LN commutes with a row gather), then fused
    # final LN + text_projection on only the B gathered rows.
    eot = jnp.argmax(tokenized_prompts, axis=-1)
    x_eot = x[jnp.arange(B), eot]                       # (B, D) f32, JAX index glue
    return final_head(x_eot, params["head_w"], params["head_b"])  # (B, E) f32


# ----------------------------------------------------------------------------
# Parameters: synthetic construction + device prep (folding, bf16 cast)
# ----------------------------------------------------------------------------
def make_params(key, *, seq, width, heads, layers, embed_dim):
    keys = iter(jax.random.split(key, 16 + 16 * layers))

    def rnd(shape, s=0.02):
        return (jax.random.normal(next(keys), shape, jnp.float32) * s).astype(jnp.float32)

    params = {
        "num_heads": heads,
        "pos": rnd((seq, width)),
        "lnf_g": 1.0 + rnd((1, width), s=0.1),
        "lnf_b": rnd((1, width), s=0.1),
        "text_proj": rnd((width, embed_dim), s=width ** -0.5),
        "layers": [],
    }
    for _ in range(layers):
        params["layers"].append(
            {
                "ln1_g": 1.0 + rnd((1, width), s=0.1),
                "ln1_b": rnd((1, width), s=0.1),
                "attn_in_w": rnd((width, 3 * width)),   # (in, out) = in_proj_weight.T
                "attn_in_b": rnd((1, 3 * width)),
                "attn_out_w": rnd((width, width)),      # out_proj.weight.T
                "attn_out_b": rnd((1, width)),
                "ln2_g": 1.0 + rnd((1, width), s=0.1),
                "ln2_b": rnd((1, width), s=0.1),
                "mlp_fc_w": rnd((width, 4 * width)),    # c_fc.weight.T
                "mlp_fc_b": rnd((1, 4 * width)),
                "mlp_proj_w": rnd((4 * width, width)),  # c_proj.weight.T
                "mlp_proj_b": rnd((1, width)),
            }
        )
    return params


def prepare_params(raw):
    """One-time prep: fold LN affines into the following projection
    (W' = diag(g) @ W, b' = beta @ W + b), fold 1/sqrt(hd) into the Q slice of
    the QKV weights/bias, and cast matmul weights to bf16 (biases stay f32)."""
    D = raw["pos"].shape[-1]
    H = raw["num_heads"]
    E = raw["text_proj"].shape[1]
    scale = 1.0 / math.sqrt(D // H)

    def fold_ln(g, beta, w, bias):
        g = g.reshape(-1)
        beta = beta.reshape(1, -1)
        return g.reshape(-1, 1) * w, beta @ w + bias

    out = {"num_heads": H, "pos": raw["pos"].astype(jnp.float32), "layers": []}

    head_w, head_b = fold_ln(raw["lnf_g"], raw["lnf_b"], raw["text_proj"],
                             jnp.zeros((1, E), jnp.float32))
    out["head_w"] = head_w.astype(jnp.bfloat16)
    out["head_b"] = head_b.astype(jnp.float32)

    for lyr in raw["layers"]:
        qkv_w, qkv_b = fold_ln(lyr["ln1_g"], lyr["ln1_b"],
                               lyr["attn_in_w"], lyr["attn_in_b"])
        qkv_w = qkv_w.at[:, :D].multiply(scale)   # fold attention scale into Q
        qkv_b = qkv_b.at[:, :D].multiply(scale)
        fc_w, fc_b = fold_ln(lyr["ln2_g"], lyr["ln2_b"],
                             lyr["mlp_fc_w"], lyr["mlp_fc_b"])
        out["layers"].append({
            "attn_qkv_w": qkv_w.astype(jnp.bfloat16),
            "attn_qkv_b": qkv_b.astype(jnp.float32),
            "attn_out_w": lyr["attn_out_w"].astype(jnp.bfloat16),
            "attn_out_b": lyr["attn_out_b"].astype(jnp.float32),
            "mlp_fc_w": fc_w.astype(jnp.bfloat16),
            "mlp_fc_b": fc_b.astype(jnp.float32),
            "mlp_proj_w": lyr["mlp_proj_w"].astype(jnp.bfloat16),
            "mlp_proj_b": lyr["mlp_proj_b"].astype(jnp.float32),
        })
    return out


if __name__ == "__main__":
    B, S, D, H, L, E = 2, 8, 64, 4, 2, 32
    key = jax.random.PRNGKey(0)
    k_p, k_t, k_w = jax.random.split(key, 3)

    prompts = jax.random.normal(k_p, (B, S, D), jnp.float32) * 0.02
    # synthetic token ids; argmax along seq marks the EOT position
    tokenized_prompts = jax.random.randint(k_t, (B, S), 1, 100, dtype=jnp.int32)
    tokenized_prompts = tokenized_prompts.at[0, 5].set(1000)
    tokenized_prompts = tokenized_prompts.at[1, 7].set(1000)

    raw_params = make_params(k_w, seq=S, width=D, heads=H, layers=L, embed_dim=E)
    params = prepare_params(raw_params)

    out = text_encoder_forward(prompts, tokenized_prompts, params)
    out = jax.block_until_ready(out)
    assert out.shape == (B, E) and out.dtype == jnp.float32
    assert bool(jnp.all(jnp.isfinite(out)))
    print("KERNEL_OK")
</pallas_src>

<mosaic_0001>
module attributes {stable_mosaic.version = 11 : i64} {
  func.func @attn_block_kernel(%arg0: i32, %arg1: memref<1x8x64xf32, #tpu.memory_space<vmem>>, %arg2: memref<64x192xbf16, #tpu.memory_space<vmem>>, %arg3: memref<1x192xf32, #tpu.memory_space<vmem>>, %arg4: memref<64x64xbf16, #tpu.memory_space<vmem>>, %arg5: memref<1x64xf32, #tpu.memory_space<vmem>>, %arg6: memref<1x8x64xf32, #tpu.memory_space<vmem>>, %arg7: memref<8x64xbf16, #tpu.memory_space<vmem>>) attributes {dimension_semantics = [#tpu.dimension_semantics<parallel>], iteration_bounds = array<i64: 2>, scalar_prefetch = 0 : i64, scratch_operands = 1 : i64, tpu.core_type = #tpu.core_type<tc>, window_params = [{transform_indices = @transform_0, window_bounds = array<i64: 1, 8, 64>}, {pipeline_mode = #tpu.pipeline_mode<synchronous>, transform_indices = @transform_1, window_bounds = array<i64: 64, 192>}, {pipeline_mode = #tpu.pipeline_mode<synchronous>, transform_indices = @transform_2, window_bounds = array<i64: 1, 192>}, {pipeline_mode = #tpu.pipeline_mode<synchronous>, transform_indices = @transform_3, window_bounds = array<i64: 64, 64>}, {pipeline_mode = #tpu.pipeline_mode<synchronous>, transform_indices = @transform_4, window_bounds = array<i64: 1, 64>}, {transform_indices = @transform_5, window_bounds = array<i64: 1, 8, 64>}]} {
    %c0 = arith.constant 0 : index
    %c0_0 = arith.constant 0 : index
    %c0_1 = arith.constant 0 : index
    %0 = vector.load %arg1[%c0, %c0_0, %c0_1] : memref<1x8x64xf32, #tpu.memory_space<vmem>>, vector<1x8x64xf32>
    %1 = vector.shape_cast %0 : vector<1x8x64xf32> to vector<8x64xf32>
    %cst = arith.constant dense<0.000000e+00> : vector<8xf32>
    %2 = vector.multi_reduction <add>, %1, %cst [1] : vector<8x64xf32> to vector<8xf32>
    %3 = vector.shape_cast %2 : vector<8xf32> to vector<8x1xf32>
    %cst_2 = arith.constant 6.400000e+01 : f32
    %4 = vector.broadcast %cst_2 : f32 to vector<8x1xf32>
    %5 = arith.divf %3, %4 : vector<8x1xf32>
    %6 = vector.broadcast %5 : vector<8x1xf32> to vector<8x64xf32>
    %7 = arith.subf %1, %6 : vector<8x64xf32>
    %8 = arith.mulf %7, %7 : vector<8x64xf32>
    %cst_3 = arith.constant dense<0.000000e+00> : vector<8xf32>
    %9 = vector.multi_reduction <add>, %8, %cst_3 [1] : vector<8x64xf32> to vector<8xf32>
    %10 = vector.shape_cast %9 : vector<8xf32> to vector<8x1xf32>
    %cst_4 = arith.constant 6.400000e+01 : f32
    %11 = vector.broadcast %cst_4 : f32 to vector<8x1xf32>
    %12 = arith.divf %10, %11 : vector<8x1xf32>
    %13 = vector.broadcast %5 : vector<8x1xf32> to vector<8x64xf32>
    %14 = arith.subf %1, %13 : vector<8x64xf32>
    %cst_5 = arith.constant 9.99999974E-6 : f32
    %15 = vector.broadcast %cst_5 : f32 to vector<8x1xf32>
    %16 = arith.addf %12, %15 : vector<8x1xf32>
    %17 = math.rsqrt %16 : vector<8x1xf32>
    %18 = vector.broadcast %17 : vector<8x1xf32> to vector<8x64xf32>
    %19 = arith.mulf %14, %18 : vector<8x64xf32>
    %20 = arith.truncf %19 : vector<8x64xf32> to vector<8x64xbf16>
    %c0_6 = arith.constant 0 : index
    %c0_7 = arith.constant 0 : index
    %21 = vector.load %arg2[%c0_6, %c0_7] : memref<64x192xbf16, #tpu.memory_space<vmem>>, vector<64x192xbf16>
    %cst_8 = arith.constant dense<0.000000e+00> : vector<8x192xf32>
    %22 = tpu.matmul %20, %21, %cst_8 {dimension_numbers = #tpu.dot_dimension_numbers<[1], [0], [0], [1], [0, 0, 1, 1], [], []>} : vector<8x64xbf16>, vector<64x192xbf16>, vector<8x192xf32> -> vector<8x192xf32>
    %c0_9 = arith.constant 0 : index
    %c0_10 = arith.constant 0 : index
    %23 = vector.load %arg3[%c0_9, %c0_10] : memref<1x192xf32, #tpu.memory_space<vmem>>, vector<1x192xf32>
    %24 = vector.broadcast %23 : vector<1x192xf32> to vector<8x192xf32>
    %25 = arith.addf %22, %24 : vector<8x192xf32>
    %26 = arith.truncf %25 : vector<8x192xf32> to vector<8x192xbf16>
    %27 = tpu.iota {dimensions = array<i32: 0>} : vector<8x8xi32>
    %28 = tpu.iota {dimensions = array<i32: 1>} : vector<8x8xi32>
    %29 = arith.cmpi sgt, %28, %27 : vector<8x8xi32>
    %30 = vector.extract_strided_slice %26 {offsets = [0, 0], sizes = [8, 16], strides = [1, 1]} : vector<8x192xbf16> to vector<8x16xbf16>
    %31 = vector.extract_strided_slice %26 {offsets = [0, 64], sizes = [8, 16], strides = [1, 1]} : vector<8x192xbf16> to vector<8x16xbf16>
    %32 = vector.extract_strided_slice %26 {offsets = [0, 128], sizes = [8, 16], strides = [1, 1]} : vector<8x192xbf16> to vector<8x16xbf16>
    %cst_11 = arith.constant dense<0.000000e+00> : vector<8x8xf32>
    %33 = tpu.matmul %30, %31, %cst_11 {dimension_numbers = #tpu.dot_dimension_numbers<[1], [1], [0], [0], [0, 0, 1, 0], [], []>} : vector<8x16xbf16>, vector<8x16xbf16>, vector<8x8xf32> -> vector<8x8xf32>
    %cst_12 = arith.constant -1.000000e+09 : f32
    %34 = vector.broadcast %cst_12 : f32 to vector<8x8xf32>
    %35 = arith.select %29, %34, %33 : vector<8x8xi1>, vector<8x8xf32>
    %cst_13 = arith.constant dense<0xFF800000> : vector<8xf32>
    %36 = vector.multi_reduction <maximumf>, %35, %cst_13 [1] : vector<8x8xf32> to vector<8xf32>
    %37 = vector.shape_cast %36 : vector<8xf32> to vector<8x1xf32>
    %38 = vector.broadcast %37 : vector<8x1xf32> to vector<8x8xf32>
    %39 = arith.subf %35, %38 : vector<8x8xf32>
    %40 = math.exp %39 : vector<8x8xf32>
    %41 = arith.truncf %40 : vector<8x8xf32> to vector<8x8xbf16>
    %cst_14 = arith.constant dense<0.000000e+00> : vector<8x16xf32>
    %42 = tpu.matmul %41, %32, %cst_14 {dimension_numbers = #tpu.dot_dimension_numbers<[1], [0], [0], [1], [0, 0, 1, 1], [], []>} : vector<8x8xbf16>, vector<8x16xbf16>, vector<8x16xf32> -> vector<8x16xf32>
    %cst_15 = arith.constant dense<0.000000e+00> : vector<8xf32>
    %43 = vector.multi_reduction <add>, %40, %cst_15 [1] : vector<8x8xf32> to vector<8xf32>
    %44 = vector.shape_cast %43 : vector<8xf32> to vector<8x1xf32>
    %45 = tpu.reciprocal %44 {approx = true} : vector<8x1xf32> -> vector<8x1xf32>
    %46 = vector.broadcast %45 : vector<8x1xf32> to vector<8x16xf32>
    %47 = arith.mulf %42, %46 : vector<8x16xf32>
    %48 = arith.truncf %47 : vector<8x16xf32> to vector<8x16xbf16>
    %c0_16 = arith.constant 0 : index
    %c0_17 = arith.constant 0 : index
    %49 = vector.load %arg7[%c0_16, %c0_17] : memref<8x64xbf16, #tpu.memory_space<vmem>>, vector<8x16xbf16>
    tpu.vector_store %arg7[%c0_16, %c0_17], %48 {strides = array<i32>} : memref<8x64xbf16, #tpu.memory_space<vmem>>, vector<8x16xbf16>,
    %50 = vector.extract_strided_slice %26 {offsets = [0, 16], sizes = [8, 16], strides = [1, 1]} : vector<8x192xbf16> to vector<8x16xbf16>
    %51 = vector.extract_strided_slice %26 {offsets = [0, 80], sizes = [8, 16], strides = [1, 1]} : vector<8x192xbf16> to vector<8x16xbf16>
    %52 = vector.extract_strided_slice %26 {offsets = [0, 144], sizes = [8, 16], strides = [1, 1]} : vector<8x192xbf16> to vector<8x16xbf16>
    %cst_18 = arith.constant dense<0.000000e+00> : vector<8x8xf32>
    %53 = tpu.matmul %50, %51, %cst_18 {dimension_numbers = #tpu.dot_dimension_numbers<[1], [1], [0], [0], [0, 0, 1, 0], [], []>} : vector<8x16xbf16>, vector<8x16xbf16>, vector<8x8xf32> -> vector<8x8xf32>
    %cst_19 = arith.constant -1.000000e+09 : f32
    %54 = vector.broadcast %cst_19 : f32 to vector<8x8xf32>
    %55 = arith.select %29, %54, %53 : vector<8x8xi1>, vector<8x8xf32>
    %cst_20 = arith.constant dense<0xFF800000> : vector<8xf32>
    %56 = vector.multi_reduction <maximumf>, %55, %cst_20 [1] : vector<8x8xf32> to vector<8xf32>
    %57 = vector.shape_cast %56 : vector<8xf32> to vector<8x1xf32>
    %58 = vector.broadcast %57 : vector<8x1xf32> to vector<8x8xf32>
    %59 = arith.subf %55, %58 : vector<8x8xf32>
    %60 = math.exp %59 : vector<8x8xf32>
    %61 = arith.truncf %60 : vector<8x8xf32> to vector<8x8xbf16>
    %cst_21 = arith.constant dense<0.000000e+00> : vector<8x16xf32>
    %62 = tpu.matmul %61, %52, %cst_21 {dimension_numbers = #tpu.dot_dimension_numbers<[1], [0], [0], [1], [0, 0, 1, 1], [], []>} : vector<8x8xbf16>, vector<8x16xbf16>, vector<8x16xf32> -> vector<8x16xf32>
    %cst_22 = arith.constant dense<0.000000e+00> : vector<8xf32>
    %63 = vector.multi_reduction <add>, %60, %cst_22 [1] : vector<8x8xf32> to vector<8xf32>
    %64 = vector.shape_cast %63 : vector<8xf32> to vector<8x1xf32>
    %65 = tpu.reciprocal %64 {approx = true} : vector<8x1xf32> -> vector<8x1xf32>
    %66 = vector.broadcast %65 : vector<8x1xf32> to vector<8x16xf32>
    %67 = arith.mulf %62, %66 : vector<8x16xf32>
    %68 = arith.truncf %67 : vector<8x16xf32> to vector<8x16xbf16>
    %c0_23 = arith.constant 0 : index
    %c16 = arith.constant 16 : index
    %69 = vector.load %arg7[%c0_23, %c16] : memref<8x64xbf16, #tpu.memory_space<vmem>>, vector<8x16xbf16>
    tpu.vector_store %arg7[%c0_23, %c16], %68 {strides = array<i32>} : memref<8x64xbf16, #tpu.memory_space<vmem>>, vector<8x16xbf16>,
    %70 = vector.extract_strided_slice %26 {offsets = [0, 32], sizes = [8, 16], strides = [1, 1]} : vector<8x192xbf16> to vector<8x16xbf16>
    %71 = vector.extract_strided_slice %26 {offsets = [0, 96], sizes = [8, 16], strides = [1, 1]} : vector<8x192xbf16> to vector<8x16xbf16>
    %72 = vector.extract_strided_slice %26 {offsets = [0, 160], sizes = [8, 16], strides = [1, 1]} : vector<8x192xbf16> to vector<8x16xbf16>
    %cst_24 = arith.constant dense<0.000000e+00> : vector<8x8xf32>
    %73 = tpu.matmul %70, %71, %cst_24 {dimension_numbers = #tpu.dot_dimension_numbers<[1], [1], [0], [0], [0, 0, 1, 0], [], []>} : vector<8x16xbf16>, vector<8x16xbf16>, vector<8x8xf32> -> vector<8x8xf32>
    %cst_25 = arith.constant -1.000000e+09 : f32
    %74 = vector.broadcast %cst_25 : f32 to vector<8x8xf32>
    %75 = arith.select %29, %74, %73 : vector<8x8xi1>, vector<8x8xf32>
    %cst_26 = arith.constant dense<0xFF800000> : vector<8xf32>
    %76 = vector.multi_reduction <maximumf>, %75, %cst_26 [1] : vector<8x8xf32> to vector<8xf32>
    %77 = vector.shape_cast %76 : vector<8xf32> to vector<8x1xf32>
    %78 = vector.broadcast %77 : vector<8x1xf32> to vector<8x8xf32>
    %79 = arith.subf %75, %78 : vector<8x8xf32>
    %80 = math.exp %79 : vector<8x8xf32>
    %81 = arith.truncf %80 : vector<8x8xf32> to vector<8x8xbf16>
    %cst_27 = arith.constant dense<0.000000e+00> : vector<8x16xf32>
    %82 = tpu.matmul %81, %72, %cst_27 {dimension_numbers = #tpu.dot_dimension_numbers<[1], [0], [0], [1], [0, 0, 1, 1], [], []>} : vector<8x8xbf16>, vector<8x16xbf16>, vector<8x16xf32> -> vector<8x16xf32>
    %cst_28 = arith.constant dense<0.000000e+00> : vector<8xf32>
    %83 = vector.multi_reduction <add>, %80, %cst_28 [1] : vector<8x8xf32> to vector<8xf32>
    %84 = vector.shape_cast %83 : vector<8xf32> to vector<8x1xf32>
    %85 = tpu.reciprocal %84 {approx = true} : vector<8x1xf32> -> vector<8x1xf32>
    %86 = vector.broadcast %85 : vector<8x1xf32> to vector<8x16xf32>
    %87 = arith.mulf %82, %86 : vector<8x16xf32>
    %88 = arith.truncf %87 : vector<8x16xf32> to vector<8x16xbf16>
    %c0_29 = arith.constant 0 : index
    %c32 = arith.constant 32 : index
    %89 = vector.load %arg7[%c0_29, %c32] : memref<8x64xbf16, #tpu.memory_space<vmem>>, vector<8x16xbf16>
    tpu.vector_store %arg7[%c0_29, %c32], %88 {strides = array<i32>} : memref<8x64xbf16, #tpu.memory_space<vmem>>, vector<8x16xbf16>,
    %90 = vector.extract_strided_slice %26 {offsets = [0, 48], sizes = [8, 16], strides = [1, 1]} : vector<8x192xbf16> to vector<8x16xbf16>
    %91 = vector.extract_strided_slice %26 {offsets = [0, 112], sizes = [8, 16], strides = [1, 1]} : vector<8x192xbf16> to vector<8x16xbf16>
    %92 = vector.extract_strided_slice %26 {offsets = [0, 176], sizes = [8, 16], strides = [1, 1]} : vector<8x192xbf16> to vector<8x16xbf16>
    %cst_30 = arith.constant dense<0.000000e+00> : vector<8x8xf32>
    %93 = tpu.matmul %90, %91, %cst_30 {dimension_numbers = #tpu.dot_dimension_numbers<[1], [1], [0], [0], [0, 0, 1, 0], [], []>} : vector<8x16xbf16>, vector<8x16xbf16>, vector<8x8xf32> -> vector<8x8xf32>
    %cst_31 = arith.constant -1.000000e+09 : f32
    %94 = vector.broadcast %cst_31 : f32 to vector<8x8xf32>
    %95 = arith.select %29, %94, %93 : vector<8x8xi1>, vector<8x8xf32>
    %cst_32 = arith.constant dense<0xFF800000> : vector<8xf32>
    %96 = vector.multi_reduction <maximumf>, %95, %cst_32 [1] : vector<8x8xf32> to vector<8xf32>
    %97 = vector.shape_cast %96 : vector<8xf32> to vector<8x1xf32>
    %98 = vector.broadcast %97 : vector<8x1xf32> to vector<8x8xf32>
    %99 = arith.subf %95, %98 : vector<8x8xf32>
    %100 = math.exp %99 : vector<8x8xf32>
    %101 = arith.truncf %100 : vector<8x8xf32> to vector<8x8xbf16>
    %cst_33 = arith.constant dense<0.000000e+00> : vector<8x16xf32>
    %102 = tpu.matmul %101, %92, %cst_33 {dimension_numbers = #tpu.dot_dimension_numbers<[1], [0], [0], [1], [0, 0, 1, 1], [], []>} : vector<8x8xbf16>, vector<8x16xbf16>, vector<8x16xf32> -> vector<8x16xf32>
    %cst_34 = arith.constant dense<0.000000e+00> : vector<8xf32>
    %103 = vector.multi_reduction <add>, %100, %cst_34 [1] : vector<8x8xf32> to vector<8xf32>
    %104 = vector.shape_cast %103 : vector<8xf32> to vector<8x1xf32>
    %105 = tpu.reciprocal %104 {approx = true} : vector<8x1xf32> -> vector<8x1xf32>
    %106 = vector.broadcast %105 : vector<8x1xf32> to vector<8x16xf32>
    %107 = arith.mulf %102, %106 : vector<8x16xf32>
    %108 = arith.truncf %107 : vector<8x16xf32> to vector<8x16xbf16>
    %c0_35 = arith.constant 0 : index
    %c48 = arith.constant 48 : index
    %109 = vector.load %arg7[%c0_35, %c48] : memref<8x64xbf16, #tpu.memory_space<vmem>>, vector<8x16xbf16>
    tpu.vector_store %arg7[%c0_35, %c48], %108 {strides = array<i32>} : memref<8x64xbf16, #tpu.memory_space<vmem>>, vector<8x16xbf16>,
    %c0_36 = arith.constant 0 : index
    %c0_37 = arith.constant 0 : index
    %110 = vector.load %arg7[%c0_36, %c0_37] : memref<8x64xbf16, #tpu.memory_space<vmem>>, vector<8x64xbf16>
    %c0_38 = arith.constant 0 : index
    %c0_39 = arith.constant 0 : index
    %111 = vector.load %arg4[%c0_38, %c0_39] : memref<64x64xbf16, #tpu.memory_space<vmem>>, vector<64x64xbf16>
    %cst_40 = arith.constant dense<0.000000e+00> : vector<8x64xf32>
    %112 = tpu.matmul %110, %111, %cst_40 {dimension_numbers = #tpu.dot_dimension_numbers<[1], [0], [0], [1], [0, 0, 1, 1], [], []>} : vector<8x64xbf16>, vector<64x64xbf16>, vector<8x64xf32> -> vector<8x64xf32>
    %c0_41 = arith.constant 0 : index
    %c0_42 = arith.constant 0 : index
    %113 = vector.load %arg5[%c0_41, %c0_42] : memref<1x64xf32, #tpu.memory_space<vmem>>, vector<1x64xf32>
    %114 = vector.broadcast %113 : vector<1x64xf32> to vector<8x64xf32>
    %115 = arith.addf %112, %114 : vector<8x64xf32>
    %116 = arith.addf %115, %1 : vector<8x64xf32>
    %c0_43 = arith.constant 0 : index
    %c0_44 = arith.constant 0 : index
    %c0_45 = arith.constant 0 : index
    %117 = vector.load %arg6[%c0_43, %c0_44, %c0_45] : memref<1x8x64xf32, #tpu.memory_space<vmem>>, vector<1x8x64xf32>
    %118 = vector.shape_cast %117 : vector<1x8x64xf32> to vector<8x64xf32>
    %119 = vector.shape_cast %116 : vector<8x64xf32> to vector<1x8x64xf32>
    tpu.vector_store %arg6[%c0_43, %c0_44, %c0_45], %119 {strides = array<i32>} : memref<1x8x64xf32, #tpu.memory_space<vmem>>, vector<1x8x64xf32>,
    return
  }
  func.func @transform_0(%arg0: i32) -> (i32, i32, i32) {
    %c0_i32 = arith.constant 0 : i32
    %c0_i32_0 = arith.constant 0 : i32
    %c0_i32_1 = arith.constant 0 : i32
    return %arg0, %c0_i32, %c0_i32_0 : i32, i32, i32
  }
  func.func @transform_1(%arg0: i32) -> (i32, i32) {
    %c0_i32 = arith.constant 0 : i32
    %c0_i32_0 = arith.constant 0 : i32
    %c0_i32_1 = arith.constant 0 : i32
    return %c0_i32, %c0_i32_0 : i32, i32
  }
  func.func @transform_2(%arg0: i32) -> (i32, i32) {
    %c0_i32 = arith.constant 0 : i32
    %c0_i32_0 = arith.constant 0 : i32
    %c0_i32_1 = arith.constant 0 : i32
    return %c0_i32, %c0_i32_0 : i32, i32
  }
  func.func @transform_3(%arg0: i32) -> (i32, i32) {
    %c0_i32 = arith.constant 0 : i32
    %c0_i32_0 = arith.constant 0 : i32
    %c0_i32_1 = arith.constant 0 : i32
    return %c0_i32, %c0_i32_0 : i32, i32
  }
  func.func @transform_4(%arg0: i32) -> (i32, i32) {
    %c0_i32 = arith.constant 0 : i32
    %c0_i32_0 = arith.constant 0 : i32
    %c0_i32_1 = arith.constant 0 : i32
    return %c0_i32, %c0_i32_0 : i32, i32
  }
  func.func @transform_5(%arg0: i32) -> (i32, i32, i32) {
    %c0_i32 = arith.constant 0 : i32
    %c0_i32_0 = arith.constant 0 : i32
    %c0_i32_1 = arith.constant 0 : i32
    return %arg0, %c0_i32, %c0_i32_0 : i32, i32, i32
  }
}

</mosaic_0001>

<llo_original>
// kernel: tpu_custom_call.1
$region0: #{tpu_custom_call.1}
  #allocation0 [shape = 'u32[]', space=smem, size = 0x4, offset = 0x4, fixed_abs, tag = 'smem constant byte address 0x4 - core index']
  #allocation1 [shape = 'u32[144,128]{1,0:T(1,128)}', space=vmem, size = 0x12000, scoped, tag = 'internal scratch']
  #allocation2 [shape = 'bf16[8,64]{1,0:T(8,128)(2,1)}', space=vmem, size = 0x800, scoped, tag = 'scratch operand']
  %s0 = inlined_call_operand.hbm [shape: f32[2,8,64], index: 0, kind: input, shape index: {}]
  %s1 = inlined_call_operand.hbm [shape: bf16[64,192], index: 1, kind: input, shape index: {}]
  %s2 = inlined_call_operand.vmem [shape: f32[1,192], index: 2, kind: input, shape index: {}]
  %s3 = inlined_call_operand.hbm [shape: bf16[64,64], index: 3, kind: input, shape index: {}]
  %s4 = inlined_call_operand.vmem [shape: f32[1,64], index: 4, kind: input, shape index: {}]
  %s5 = inlined_call_operand.hbm [shape: f32[2,8,64], index: 5, kind: output, shape index: {}]
  %s6 = sld [smem:[#allocation0]]
  $region65: #{tpu_custom_call.1} parent=0
    _
  %s8 = ssub.s32 1, %s6
  %s9 = scalar_select 0, %s8, %s6
  $region1: #{tpu_custom_call.1} parent=0
    #allocation3 [shape = 'u8[8192]{0}', space=vmem, size = 0x2000, scoped, tag = 'input window, operand 0']
    #allocation4 [shape = 's32[2]{0}', space=sflag, size = 0x8, scoped, tag = 'scoped memory for tpu_custom_call.1']
    #allocation5 [shape = 's32[2]{0}', space=sflag, size = 0x8, scoped, tag = 'scoped memory for tpu_custom_call.1']
    #allocation6 [shape = 'u8[32768]{0}', space=vmem, size = 0x8000, scoped, tag = 'input window, operand 1, single buffered']
    #allocation7 [shape = 's32[1]{0}', space=sflag, size = 0x4, scoped, tag = 'scoped memory for tpu_custom_call.1']
    #allocation8 [shape = 'u8[16384]{0}', space=vmem, size = 0x4000, scoped, tag = 'input window, operand 3, single buffered']
    #allocation9 [shape = 'u8[8192]{0}', space=vmem, size = 0x2000, scoped, tag = 'output window, operand 0']
    %10 = vsyncpa [#allocation4], 0
    %s11 = scalar_lea.sflag [#allocation4], 1
    %12 = vsyncpa %s11, 0
    %13 = vsyncpa [#allocation7], 0
    %14 = vsyncpa [#allocation5], 0
    %s15 = scalar_lea.sflag [#allocation5], 1
    %16 = vsyncpa %s15, 0
    loop: start=0, step=1, limit=4
    $region2: #{tpu_custom_call.1} parent=1 // loop_pre_header
      _
    $region3: #{tpu_custom_call.1} parent=1 // loop_header
      %s18 = sphi 0, %s22
      %p19 = scmp.ge.s32.totalorder %s18, 4
      %s28 = sphi 0, %s30
      %s31 = sphi 0, %s28
      %s32 = sphi 0, %s31
      %s48 = sphi 0, %s32
      %s52 = sphi 0, %s52
      %s54 = sphi 0, %s52
      %s55 = sphi 0, %s54
      %s69 = sphi 0, %s55
      %s73 = sphi 0, %s73
      %s75 = sphi 0, %s73
      %s76 = sphi 0, %s75
      %s90 = sphi 0, %s76
      %s94 = sphi 0, %s94
      %s96 = sphi 0, %s94
      %s97 = sphi 0, %s96
      %s111 = sphi 0, %s97
      %s115 = sphi 0, %s115
      %s117 = sphi 0, %s115
      %s118 = sphi 0, %s117
      %s132 = sphi 0, %s118
      %s138 = sphi 0, %s140
      %s141 = sphi 0, %s138
      %s142 = sphi 0, %s141
      %s158 = sphi 0, %s142
    $region4: #{tpu_custom_call.1} parent=1 // loop_header_branch
      %21 = sbr.rel (%p19) target = $region8
    $region5: #{tpu_custom_call.1} parent=1 // loop_body
      %s23 = ssub.s32 %s18, 1
      %s24 = ssub.s32 %s18, 2
      %s25 = sadd.s32 %s18, 1
      %s26 = ssub.s32 %s18, %s25
      %p27 = scmp.eq.s32.totalorder %s26, 0
      %s29 = sadd.s32 %s28, 1
      %s30 = scalar_select %p27, %s28, %s29
      %p33 = pneg %p27
      %p34 = scmp.eq.s32.totalorder %s18, 1
      %p35 = por %p33, %p34
      %p36 = scmp.ne.s32.totalorder %s28, %s31
      %p37 = scmp.eq.s32.totalorder %s18, 0
      %p38 = por %p36, %p37
      %p39 = scmp.ne.s32.totalorder %s28, %s31
      %p40 = scmp.eq.s32.totalorder %s23, 1
      %p41 = por %p39, %p40
      %p42 = scmp.ne.s32.totalorder %s31, %s32
      %p43 = scmp.eq.s32.totalorder %s23, 0
      %p44 = por %p42, %p43
      %p45 = scmp.ne.s32.totalorder %s31, %s32
      %p46 = scmp.eq.s32.totalorder %s24, 1
      %p47 = por %p45, %p46
      %p49 = scmp.ne.s32.totalorder %s32, %s48
      %p50 = scmp.eq.s32.totalorder %s24, 0
      %p51 = por %p49, %p50
      %s53 = sadd.s32 %s52, 1
      %p56 = scmp.eq.s32.totalorder %s18, 1
      %p57 = scmp.ne.s32.totalorder %s52, %s54
      %p58 = scmp.eq.s32.totalorder %s18, 0
      %p59 = por %p57, %p58
      %p60 = scmp.ne.s32.totalorder %s52, %s54
      %p61 = scmp.eq.s32.totalorder %s23, 1
      %p62 = por %p60, %p61
      %p63 = scmp.ne.s32.totalorder %s54, %s55
      %p64 = scmp.eq.s32.totalorder %s23, 0
      %p65 = por %p63, %p64
      %p66 = scmp.ne.s32.totalorder %s54, %s55
      %p67 = scmp.eq.s32.totalorder %s24, 1
      %p68 = por %p66, %p67
      %p70 = scmp.ne.s32.totalorder %s55, %s69
      %p71 = scmp.eq.s32.totalorder %s24, 0
      %p72 = por %p70, %p71
      %s74 = sadd.s32 %s73, 1
      %p77 = scmp.eq.s32.totalorder %s18, 1
      %p78 = scmp.ne.s32.totalorder %s73, %s75
      %p79 = scmp.eq.s32.totalorder %s18, 0
      %p80 = por %p78, %p79
      %p81 = scmp.ne.s32.totalorder %s73, %s75
      %p82 = scmp.eq.s32.totalorder %s23, 1
      %p83 = por %p81, %p82
      %p84 = scmp.ne.s32.totalorder %s75, %s76
      %p85 = scmp.eq.s32.totalorder %s23, 0
      %p86 = por %p84, %p85
      %p87 = scmp.ne.s32.totalorder %s75, %s76
      %p88 = scmp.eq.s32.totalorder %s24, 1
      %p89 = por %p87, %p88
      %p91 = scmp.ne.s32.totalorder %s76, %s90
      %p92 = scmp.eq.s32.totalorder %s24, 0
      %p93 = por %p91, %p92
      %s95 = sadd.s32 %s94, 1
      %p98 = scmp.eq.s32.totalorder %s18, 1
      %p99 = scmp.ne.s32.totalorder %s94, %s96
      %p100 = scmp.eq.s32.totalorder %s18, 0
      %p101 = por %p99, %p100
      %p102 = scmp.ne.s32.totalorder %s94, %s96
      %p103 = scmp.eq.s32.totalorder %s23, 1
      %p104 = por %p102, %p103
      %p105 = scmp.ne.s32.totalorder %s96, %s97
      %p106 = scmp.eq.s32.totalorder %s23, 0
      %p107 = por %p105, %p106
      %p108 = scmp.ne.s32.totalorder %s96, %s97
      %p109 = scmp.eq.s32.totalorder %s24, 1
      %p110 = por %p108, %p109
      %p112 = scmp.ne.s32.totalorder %s97, %s111
      %p113 = scmp.eq.s32.totalorder %s24, 0
      %p114 = por %p112, %p113
      %s116 = sadd.s32 %s115, 1
      %p119 = scmp.eq.s32.totalorder %s18, 1
      %p120 = scmp.ne.s32.totalorder %s115, %s117
      %p121 = scmp.eq.s32.totalorder %s18, 0
      %p122 = por %p120, %p121
      %p123 = scmp.ne.s32.totalorder %s115, %s117
      %p124 = scmp.eq.s32.totalorder %s23, 1
      %p125 = por %p123, %p124
      %p126 = scmp.ne.s32.totalorder %s117, %s118
      %p127 = scmp.eq.s32.totalorder %s23, 0
      %p128 = por %p126, %p127
      %p129 = scmp.ne.s32.totalorder %s117, %s118
      %p130 = scmp.eq.s32.totalorder %s24, 1
      %p131 = por %p129, %p130
      %p133 = scmp.ne.s32.totalorder %s118, %s132
      %p134 = scmp.eq.s32.totalorder %s24, 0
      %p135 = por %p133, %p134
      %s136 = ssub.s32 %s18, %s25
      %p137 = scmp.eq.s32.totalorder %s136, 0
      %s139 = sadd.s32 %s138, 1
      %s140 = scalar_select %p137, %s138, %s139
      %p143 = pneg %p137
      %p144 = scmp.eq.s32.totalorder %s18, 1
      %p145 = por %p143, %p144
      %p146 = scmp.ne.s32.totalorder %s138, %s141
      %p147 = scmp.eq.s32.totalorder %s18, 0
      %p148 = por %p146, %p147
      %p149 = scmp.ne.s32.totalorder %s138, %s141
      %p150 = scmp.eq.s32.totalorder %s23, 1
      %p151 = por %p149, %p150
      %p152 = scmp.ne.s32.totalorder %s141, %s142
      %p153 = scmp.eq.s32.totalorder %s23, 0
      %p154 = por %p152, %p153
      %p155 = scmp.ne.s32.totalorder %s141, %s142
      %p156 = scmp.eq.s32.totalorder %s24, 1
      %p157 = por %p155, %p156
      %p159 = scmp.ne.s32.totalorder %s142, %s158
      %p160 = scmp.eq.s32.totalorder %s24, 0
      %p161 = por %p159, %p160
      %p162 = scmp.le.s32.totalorder 1, %s18
      %p163 = scmp.lt.s32.totalorder %s18, 3
      %p164 = pnand %p162, %p163
      %p165 = pneg %p164
      // Predicated region
      $region9: #{tpu_custom_call.1} parent=5 // pred_check
        _
      $region10: #{tpu_custom_call.1} parent=5 // pred_check_branch
        %167 = sbr.rel (%p164) target = $region12
      $region11: #{tpu_custom_call.1} parent=5 // pred_region
        %s168 = ssub.s32 %s18, 1
        // Predicated region
        $region13: #{tpu_custom_call.1} parent=11 // pred_check
          %p169 = pneg %p65
        $region14: #{tpu_custom_call.1} parent=11 // pred_check_branch
          %171 = sbr.rel (%p169) target = $region16
        $region15: #{tpu_custom_call.1} parent=11 // pred_region
          %s173 = ssub.s32 1024, 1024
          %174 = vsyncadd [#allocation7], %s173
          %s175 = sshll.u32 [#allocation6], 4
          %s176 = int_to_ptr.vmem [resolvable:$true] %s175
          %181 = dma.hbm_to_vmem [thread:$0]  %s1, 1024, %s176, [#allocation7], 128, 128, 8
        $region16: #{tpu_custom_call.1} parent=11 // pred_fallthru
          _
        // Predicated region
        $region17: #{tpu_custom_call.1} parent=11 // pred_check
          %p182 = pneg %p86
        $region18: #{tpu_custom_call.1} parent=11 // pred_check_branch
          %184 = sbr.rel (%p182) target = $region20
        $region19: #{tpu_custom_call.1} parent=11 // pred_region
          _
        $region20: #{tpu_custom_call.1} parent=11 // pred_fallthru
          _
        // Predicated region
        $region21: #{tpu_custom_call.1} parent=11 // pred_check
          %p185 = pneg %p107
        $region22: #{tpu_custom_call.1} parent=11 // pred_check_branch
          %187 = sbr.rel (%p185) target = $region24
        $region23: #{tpu_custom_call.1} parent=11 // pred_region
          %s189 = ssub.s32 512, 512
          %190 = vsyncadd [#allocation7], %s189
          %s191 = sshll.u32 [#allocation8], 4
          %s192 = int_to_ptr.vmem [resolvable:$true] %s191
          %197 = dma.hbm_to_vmem [thread:$0]  %s3, 512, %s192, [#allocation7], 64, 64, 4
        $region24: #{tpu_custom_call.1} parent=11 // pred_fallthru
          _
        // Predicated region
        $region25: #{tpu_custom_call.1} parent=11 // pred_check
          %p198 = pneg %p128
        $region26: #{tpu_custom_call.1} parent=11 // pred_check_branch
          %200 = sbr.rel (%p198) target = $region28
        $region27: #{tpu_custom_call.1} parent=11 // pred_region
          _
        $region28: #{tpu_custom_call.1} parent=11 // pred_fallthru
          _
      $region12: #{tpu_custom_call.1} parent=5 // pred_fallthru
        _
      %p201 = scmp.lt.s32.totalorder %s18, 2
      // Predicated region
      $region29: #{tpu_custom_call.1} parent=5 // pred_check
        %p202 = pneg %p201
      $region30: #{tpu_custom_call.1} parent=5 // pred_check_branch
        %204 = sbr.rel (%p202) target = $region32
      $region31: #{tpu_custom_call.1} parent=5 // pred_region
        // Predicated region
        $region33: #{tpu_custom_call.1} parent=31 // pred_check
          %p205 = pneg %p38
        $region34: #{tpu_custom_call.1} parent=31 // pred_check_branch
          %207 = sbr.rel (%p205) target = $region36
        $region35: #{tpu_custom_call.1} parent=31 // pred_region
          %s208 = sand.u32 %s28, 1
          %s209 = scalar_lea.sflag [#allocation4], %s208
          %s210 = sand.u32 %s28, 1
          %s211 = smul.addr %s210, 8
          %s212 = scalar_lea.vmem [#allocation3], %s211
          %s214 = ssub.s32 128, 128
          %215 = vsyncadd %s209, %s214
          %s216 = smul.addr %s18, 128
          %s217 = scalar_lea.hbm %s0, %s216
          %s219 = sshll.u32 %s212, 4
          %s220 = int_to_ptr.vmem [resolvable:$true] %s219
          %222 = dma.hbm_to_vmem [thread:$0]  %s217, 128, %s220, %s209
        $region36: #{tpu_custom_call.1} parent=31 // pred_fallthru
          _
      $region32: #{tpu_custom_call.1} parent=5 // pred_fallthru
        _
      %p223 = scmp.le.s32.totalorder 1, %s18
      %p224 = scmp.lt.s32.totalorder %s18, 3
      %p225 = pnand %p223, %p224
      %p226 = pneg %p225
      // Predicated region
      $region37: #{tpu_custom_call.1} parent=5 // pred_check
        _
      $region38: #{tpu_custom_call.1} parent=5 // pred_check_branch
        %228 = sbr.rel (%p225) target = $region40
      $region39: #{tpu_custom_call.1} parent=5 // pred_region
        %s229 = ssub.s32 %s18, 1
        %s230 = sand.u32 %s31, 1
        %s231 = scalar_lea.sflag [#allocation4], %s230
        %s232 = sand.u32 %s31, 1
        %s233 = smul.addr %s232, 8
        %s234 = scalar_lea.vmem [#allocation3], %s233
        // Predicated region
        $region41: #{tpu_custom_call.1} parent=39 // pred_check
          %p235 = pneg %p44
        $region42: #{tpu_custom_call.1} parent=39 // pred_check_branch
          %237 = sbr.rel (%p235) target = $region44
        $region43: #{tpu_custom_call.1} parent=39 // pred_region
          %238 = dma.done %s231, 128
        $region44: #{tpu_custom_call.1} parent=39 // pred_fallthru
          _
        // Predicated region
        $region45: #{tpu_custom_call.1} parent=39 // pred_check
          %p239 = pneg %p65
        $region46: #{tpu_custom_call.1} parent=39 // pred_check_branch
          %241 = sbr.rel (%p239) target = $region48
        $region47: #{tpu_custom_call.1} parent=39 // pred_region
          %242 = dma.done [#allocation7], 1024
        $region48: #{tpu_custom_call.1} parent=39 // pred_fallthru
          _
        // Predicated region
        $region49: #{tpu_custom_call.1} parent=39 // pred_check
          %p243 = pneg %p107
        $region50: #{tpu_custom_call.1} parent=39 // pred_check_branch
          %245 = sbr.rel (%p243) target = $region52
        $region51: #{tpu_custom_call.1} parent=39 // pred_region
          %246 = dma.done [#allocation7], 512
        $region52: #{tpu_custom_call.1} parent=39 // pred_fallthru
          _
        %s247 = sand.u32 %s31, 1
        %s248 = scalar_lea.sflag [#allocation4], %s247
        %s249 = sand.u32 %s31, 1
        %s250 = smul.addr %s249, 8
        %s251 = scalar_lea.vmem [#allocation3], %s250
        %p252 = pneg %p44
        %p253 = pneg %p41
        %p254 = pneg %p65
        %p255 = pneg %p62
        %p256 = pneg %p86
        %p257 = pneg %p83
        %p258 = pneg %p107
        %p259 = pneg %p104
        %p260 = pneg %p128
        %p261 = pneg %p125
        %p262 = pneg %p154
        %p263 = pneg %p151
        %s264 = sand.u32 %s141, 1
        %s265 = scalar_lea.sflag [#allocation5], %s264
        %s266 = sand.u32 %s141, 1
        %s267 = smul.addr %s266, 8
        %s268 = scalar_lea.vmem [#allocation9], %s267
        %v270 = vld [vmem:[%s234] sm:$0xff]
        %vm271 = vcmask 523264
        %v272 = vsel %vm271, %v270, 0.0
        %273 = vadd.xlane.f32.xlu0 %v272
        %v274 = vpop.xlane.xlu0 %273
        %v275 = vrcp.pop 64.0
        %v276 = vmul.f32 %v274, %v275
        %v277 = vsub.f32 %v270, %v276
        %v278 = vmul.f32 %v277, %v277
        %v279 = vsel %vm271, %v278, 0.0
        %280 = vadd.xlane.f32.xlu0 %v279
        %v281 = vpop.xlane.xlu0 %280
        %v282 = vmul.f32 %v281, %v275
        %v283 = vadd.f32 %v282, 1e-05
        %v284 = vrsqrt.pop %v283
        %v285 = vmul.f32 %v277, %v284
        %v286 = vpack.c.bf16 %v285, %v285
        %v287 = vld [vmem:[#allocation6] sm:$0xff]
        %v288 = vld [vmem:[#allocation6 + $0x8] sm:$0xff]
        %v289 = vld [vmem:[#allocation6 + $0x10] sm:$0xff]
        %v290 = vld [vmem:[#allocation6 + $0x18] sm:$0xff]
        %v291 = vld [vmem:[#allocation6 + $0x20] sm:$0xff]
        %v292 = vld [vmem:[#allocation6 + $0x28] sm:$0xff]
        %v293 = vld [vmem:[#allocation6 + $0x30] sm:$0xff]
        %v294 = vld [vmem:[#allocation6 + $0x38] sm:$0xff]
        %v295 = vld [vmem:[%s2] sm:$0x3]
        %v297 = vlaneseq
        %v298 = vshrl.u32 %v297, 7
        %v299 = vsub.s32 0, %v298
        %v300 = vrot.slane %v295, %v299
        %v301 = vlaneseq
        %v302 = vshrl.u32 %v301, 7
        %v303 = vsub.s32 1, %v302
        %v304 = vrot.slane %v295, %v303
        %v315 = vunpack.c.l.b16 %v287
        %v316 = vunpack.c.h.b16 %v287
        %v317 = vunpack.c.l.b16 %v288
        %v318 = vunpack.c.h.b16 %v288
        %v319 = vunpack.c.l.b16 %v289
        %v320 = vunpack.c.h.b16 %v289
        %v321 = vunpack.c.l.b16 %v290
        %v322 = vunpack.c.h.b16 %v290
        %v323 = vunpack.c.l.b16 %v291
        %v324 = vunpack.c.h.b16 %v291
        %v325 = vunpack.c.l.b16 %v292
        %v326 = vunpack.c.h.b16 %v292
        %v327 = vunpack.c.l.b16 %v293
        %v328 = vunpack.c.h.b16 %v293
        %v329 = vunpack.c.l.b16 %v294
        %v330 = vunpack.c.h.b16 %v294
        %v331 = vpack.c.b16 %v317, %v315
        %v332 = vpack.c.b16 %v318, %v316
        %v333 = vpack.c.b16 %v321, %v319
        %v334 = vpack.c.b16 %v322, %v320
        %v335 = vpack.c.b16 %v325, %v323
        %v336 = vpack.c.b16 %v326, %v324
        %v337 = vpack.c.b16 %v329, %v327
        %v338 = vpack.c.b16 %v330, %v328
        %v348 = vsel %vm271, %v286, 0
        %350 = vmatprep.subr.bf16.mxu0 %v332
        %351 = vmatpush1.bf16.msra.mxu0 %v331
        %352 = vmatprep.subr.bf16.mxu0 %v334
        %353 = vmatpush1.bf16.msra.mxu0 %v333
        %354 = vmatprep.subr.bf16.mxu0 %v336
        %355 = vmatpush1.bf16.msra.mxu0 %v335
        %356 = vmatprep.subr.bf16.mxu0 %v338
        %357 = vmatpush1.bf16.msra.mxu0 %v337
        %358 = vmatprep.subr.bf16.mxu0 0
        %359 = vmatpush1.bf16.msra.mxu0 0
        %360 = vmatprep.subr.bf16.mxu0 0
        %361 = vmatpush1.bf16.msra.mxu0 0
        %362 = vmatprep.subr.bf16.mxu0 0
        %363 = vmatpush1.bf16.msra.mxu0 0
        %364 = vmatprep.subr.bf16.mxu0 0
        %365 = vmatpush1.bf16.msra.mxu0 0
        %366 = vmatprep.subr.bf16.mxu0 0
        %367 = vmatpush1.bf16.msra.mxu0 0
        %368 = vmatprep.subr.bf16.mxu0 0
        %369 = vmatpush1.bf16.msra.mxu0 0
        %370 = vmatprep.subr.bf16.mxu0 0
        %371 = vmatpush1.bf16.msra.mxu0 0
        %372 = vmatprep.subr.bf16.mxu0 0
        %373 = vmatpush1.bf16.msra.mxu0 0
        %374 = vmatprep.subr.bf16.mxu0 0
        %375 = vmatpush1.bf16.msra.mxu0 0
        %376 = vmatprep.subr.bf16.mxu0 0
        %377 = vmatpush1.bf16.msra.mxu0 0
        %378 = vmatprep.subr.bf16.mxu0 0
        %379 = vmatpush1.bf16.msra.mxu0 0
        %380 = vmatprep.subr.bf16.mxu0 0
        %381 = vmatpush1.bf16.msra.mxu0 0
        %382 = vmatprep.mubr.bf16.mxu0 0
        %383 = vmatmul.mubr.bf16.gmra.mrb[0].mxu0 %v348
        %v384 = vpop.f32.mrb[0].mxu0
        %v385 = vadd.f32 %v300, %v384
        %v386 = vpop.f32.mrb[0].mxu0
        %v387 = vadd.f32 %v304, %v386
        %v388 = vpop.f32.mrb[0].mxu0
        %v389 = vpop.f32.mrb[0].mxu0
        %390 = vdwg.mxu0
        %v391 = vpack.c.bf16 %v385, %v385
        %v392 = vpack.c.bf16 %v387, %v387
        %v393 = vlaneseq
        %v394 = vshrl.u32 %v393, 7
        %v395 = vlaneseq
        %v396 = vand.u32 %v395, 127
        %vm397 = vcmp.gt.s32.totalorder %v396, %v394
        %399 = vrot.lane.b32.xlu0 %v391, 64
        %v400 = vpop.permute.xlu0 %399
        %vm401 = vcmask 130048
        %v403 = vsel %vm401, %v391, 0
        %v406 = vsel %vm401, %v400, 0
        %408 = vmatprep.subr.bf16.mxu0 0
        %409 = vmatpush1.bf16.xpose.msra.mxu0 %v406
        %410 = vmatprep.subr.bf16.mxu0 0
        %411 = vmatpush1.bf16.xpose.msra.mxu0 0
        %412 = vmatprep.subr.bf16.mxu0 0
        %413 = vmatpush1.bf16.xpose.msra.mxu0 0
        %414 = vmatprep.subr.bf16.mxu0 0
        %415 = vmatpush1.bf16.xpose.msra.mxu0 0
        %416 = vmatprep.subr.bf16.mxu0 0
        %417 = vmatpush1.bf16.xpose.msra.mxu0 0
        %418 = vmatprep.subr.bf16.mxu0 0
        %419 = vmatpush1.bf16.xpose.msra.mxu0 0
        %420 = vmatprep.subr.bf16.mxu0 0
        %421 = vmatpush1.bf16.xpose.msra.mxu0 0
        %422 = vmatprep.subr.bf16.mxu0 0
        %423 = vmatpush1.bf16.xpose.msra.mxu0 0
        %424 = vmatprep.subr.bf16.mxu0 0
        %425 = vmatpush1.bf16.xpose.msra.mxu0 0
        %426 = vmatprep.subr.bf16.mxu0 0
        %427 = vmatpush1.bf16.xpose.msra.mxu0 0
        %428 = vmatprep.subr.bf16.mxu0 0
        %429 = vmatpush1.bf16.xpose.msra.mxu0 0
        %430 = vmatprep.subr.bf16.mxu0 0
        %431 = vmatpush1.bf16.xpose.msra.mxu0 0
        %432 = vmatprep.subr.bf16.mxu0 0
        %433 = vmatpush1.bf16.xpose.msra.mxu0 0
        %434 = vmatprep.subr.bf16.mxu0 0
        %435 = vmatpush1.bf16.xpose.msra.mxu0 0
        %436 = vmatprep.subr.bf16.mxu0 0
        %437 = vmatpush1.bf16.xpose.msra.mxu0 0
        %438 = vmatprep.subr.bf16.mxu0 0
        %439 = vmatpush1.bf16.xpose.msra.mxu0 0
        %440 = vmatprep.mubr.bf16.mxu0 0
        %441 = vmatmul.mubr.bf16.gmra.mrb[0].mxu0 %v403
        %v442 = vpop.f32.mrb[0].mxu0
        %v443 = vadd.f32 0.0, %v442
        %v444 = vpop.f32.mrb[0].mxu0
        %v445 = vpop.f32.mrb[0].mxu0
        %v446 = vpop.f32.mrb[0].mxu0
        %447 = vdwg.mxu0
        %v448 = vsel %vm397, -1e+09, %v443
        %vm449 = vcmask 64512
        %v450 = vsel %vm449, %v448, -inf
        %451 = vmax.xlane.f32.xlu0 %v450
        %v452 = vpop.xlane.xlu0 %451
        %v453 = vsub.f32 %v448, %v452
        %v454 = vmul.f32 %v453, 1.442695
        %v455 = vpow.pop %v454
        %v456 = vpack.c.bf16 %v455, %v455
        %v458 = vsel %vm449, %v456, 0
        %vm460 = vcmask 1043456
        %v462 = vsel %vm460, %v392, 0
        %464 = vmatprep.subr.bf16.mxu0 0
        %465 = vmatpush1.bf16.msra.mxu0 %v462
        %466 = vmatprep.subr.bf16.mxu0 0
        %467 = vmatpush1.bf16.msra.mxu0 0
        %468 = vmatprep.subr.bf16.mxu0 0
        %469 = vmatpush1.bf16.msra.mxu0 0
        %470 = vmatprep.subr.bf16.mxu0 0
        %471 = vmatpush1.bf16.msra.mxu0 0
        %472 = vmatprep.subr.bf16.mxu0 0
        %473 = vmatpush1.bf16.msra.mxu0 0
        %474 = vmatprep.subr.bf16.mxu0 0
        %475 = vmatpush1.bf16.msra.mxu0 0
        %476 = vmatprep.subr.bf16.mxu0 0
        %477 = vmatpush1.bf16.msra.mxu0 0
        %478 = vmatprep.subr.bf16.mxu0 0
        %479 = vmatpush1.bf16.msra.mxu0 0
        %480 = vmatprep.subr.bf16.mxu0 0
        %481 = vmatpush1.bf16.msra.mxu0 0
        %482 = vmatprep.subr.bf16.mxu0 0
        %483 = vmatpush1.bf16.msra.mxu0 0
        %484 = vmatprep.subr.bf16.mxu0 0
        %485 = vmatpush1.bf16.msra.mxu0 0
        %486 = vmatprep.subr.bf16.mxu0 0
        %487 = vmatpush1.bf16.msra.mxu0 0
        %488 = vmatprep.subr.bf16.mxu0 0
        %489 = vmatpush1.bf16.msra.mxu0 0
        %490 = vmatprep.subr.bf16.mxu0 0
        %491 = vmatpush1.bf16.msra.mxu0 0
        %492 = vmatprep.subr.bf16.mxu0 0
        %493 = vmatpush1.bf16.msra.mxu0 0
        %494 = vmatprep.subr.bf16.mxu0 0
        %495 = vmatpush1.bf16.msra.mxu0 0
        %496 = vmatprep.mubr.bf16.mxu0 0
        %497 = vmatmul.mubr.bf16.gmra.mrb[0].mxu0 %v458
        %v498 = vpop.f32.mrb[0].mxu0
        %v499 = vadd.f32 0.0, %v498
        %v500 = vpop.f32.mrb[0].mxu0
        %v501 = vpop.f32.mrb[0].mxu0
        %v502 = vpop.f32.mrb[0].mxu0
        %503 = vdwg.mxu0
        %v504 = vsel %vm449, %v455, 0.0
        %505 = vadd.xlane.f32.xlu0 %v504
        %v506 = vpop.xlane.xlu0 %505
        %v507 = vrcp.pop %v506
        %v508 = vmul.f32 %v499, %v507
        %v509 = vpack.c.bf16 %v508, %v508
        %vm510 = vcmask 125952
        %511 = vst.msk [vmem:[#allocation2] sm:$0xf] %vm510, %v509
        %512 = vrot.lane.b32.xlu0 %v391, 112
        %v513 = vpop.permute.xlu0 %512
        %514 = vrot.lane.b32.xlu0 %v391, 48
        %v515 = vpop.permute.xlu0 %514
        %v517 = vsel %vm401, %v513, 0
        %v520 = vsel %vm401, %v515, 0
        %522 = vmatprep.subr.bf16.mxu0 0
        %523 = vmatpush1.bf16.xpose.msra.mxu0 %v520
        %524 = vmatprep.subr.bf16.mxu0 0
        %525 = vmatpush1.bf16.xpose.msra.mxu0 0
        %526 = vmatprep.subr.bf16.mxu0 0
        %527 = vmatpush1.bf16.xpose.msra.mxu0 0
        %528 = vmatprep.subr.bf16.mxu0 0
        %529 = vmatpush1.bf16.xpose.msra.mxu0 0
        %530 = vmatprep.subr.bf16.mxu0 0
        %531 = vmatpush1.bf16.xpose.msra.mxu0 0
        %532 = vmatprep.subr.bf16.mxu0 0
        %533 = vmatpush1.bf16.xpose.msra.mxu0 0
        %534 = vmatprep.subr.bf16.mxu0 0
        %535 = vmatpush1.bf16.xpose.msra.mxu0 0
        %536 = vmatprep.subr.bf16.mxu0 0
        %537 = vmatpush1.bf16.xpose.msra.mxu0 0
        %538 = vmatprep.subr.bf16.mxu0 0
        %539 = vmatpush1.bf16.xpose.msra.mxu0 0
        %540 = vmatprep.subr.bf16.mxu0 0
        %541 = vmatpush1.bf16.xpose.msra.mxu0 0
        %542 = vmatprep.subr.bf16.mxu0 0
        %543 = vmatpush1.bf16.xpose.msra.mxu0 0
        %544 = vmatprep.subr.bf16.mxu0 0
        %545 = vmatpush1.bf16.xpose.msra.mxu0 0
        %546 = vmatprep.subr.bf16.mxu0 0
        %547 = vmatpush1.bf16.xpose.msra.mxu0 0
        %548 = vmatprep.subr.bf16.mxu0 0
        %549 = vmatpush1.bf16.xpose.msra.mxu0 0
        %550 = vmatprep.subr.bf16.mxu0 0
        %551 = vmatpush1.bf16.xpose.msra.mxu0 0
        %552 = vmatprep.subr.bf16.mxu0 0
        %553 = vmatpush1.bf16.xpose.msra.mxu0 0
        %554 = vmatprep.mubr.bf16.mxu0 0
        %555 = vmatmul.mubr.bf16.gmra.mrb[0].mxu0 %v517
        %v556 = vpop.f32.mrb[0].mxu0
        %v557 = vadd.f32 0.0, %v556
        %v558 = vpop.f32.mrb[0].mxu0
        %v559 = vpop.f32.mrb[0].mxu0
        %v560 = vpop.f32.mrb[0].mxu0
        %561 = vdwg.mxu0
        %v562 = vsel %vm397, -1e+09, %v557
        %v563 = vsel %vm449, %v562, -inf
        %564 = vmax.xlane.f32.xlu0 %v563
        %v565 = vpop.xlane.xlu0 %564
        %v566 = vsub.f32 %v562, %v565
        %v567 = vmul.f32 %v566, 1.442695
        %v568 = vpow.pop %v567
        %v569 = vpack.c.bf16 %v568, %v568
        %571 = vrot.lane.b32.xlu0 %v392, 112
        %v572 = vpop.permute.xlu0 %571
        %v574 = vsel %vm449, %v569, 0
        %v577 = vsel %vm460, %v572, 0
        %579 = vmatprep.subr.bf16.mxu0 0
        %580 = vmatpush1.bf16.msra.mxu0 %v577
        %581 = vmatprep.subr.bf16.mxu0 0
        %582 = vmatpush1.bf16.msra.mxu0 0
        %583 = vmatprep.subr.bf16.mxu0 0
        %584 = vmatpush1.bf16.msra.mxu0 0
        %585 = vmatprep.subr.bf16.mxu0 0
        %586 = vmatpush1.bf16.msra.mxu0 0
        %587 = vmatprep.subr.bf16.mxu0 0
        %588 = vmatpush1.bf16.msra.mxu0 0
        %589 = vmatprep.subr.bf16.mxu0 0
        %590 = vmatpush1.bf16.msra.mxu0 0
        %591 = vmatprep.subr.bf16.mxu0 0
        %592 = vmatpush1.bf16.msra.mxu0 0
        %593 = vmatprep.subr.bf16.mxu0 0
        %594 = vmatpush1.bf16.msra.mxu0 0
        %595 = vmatprep.subr.bf16.mxu0 0
        %596 = vmatpush1.bf16.msra.mxu0 0
        %597 = vmatprep.subr.bf16.mxu0 0
        %598 = vmatpush1.bf16.msra.mxu0 0
        %599 = vmatprep.subr.bf16.mxu0 0
        %600 = vmatpush1.bf16.msra.mxu0 0
        %601 = vmatprep.subr.bf16.mxu0 0
        %602 = vmatpush1.bf16.msra.mxu0 0
        %603 = vmatprep.subr.bf16.mxu0 0
        %604 = vmatpush1.bf16.msra.mxu0 0
        %605 = vmatprep.subr.bf16.mxu0 0
        %606 = vmatpush1.bf16.msra.mxu0 0
        %607 = vmatprep.subr.bf16.mxu0 0
        %608 = vmatpush1.bf16.msra.mxu0 0
        %609 = vmatprep.subr.bf16.mxu0 0
        %610 = vmatpush1.bf16.msra.mxu0 0
        %611 = vmatprep.mubr.bf16.mxu0 0
        %612 = vmatmul.mubr.bf16.gmra.mrb[0].mxu0 %v574
        %v613 = vpop.f32.mrb[0].mxu0
        %v614 = vadd.f32 0.0, %v613
        %v615 = vpop.f32.mrb[0].mxu0
        %v616 = vpop.f32.mrb[0].mxu0
        %v617 = vpop.f32.mrb[0].mxu0
        %618 = vdwg.mxu0
        %v619 = vsel %vm449, %v568, 0.0
        %620 = vadd.xlane.f32.xlu0 %v619
        %v621 = vpop.xlane.xlu0 %620
        %v622 = vrcp.pop %v621
        %v623 = vmul.f32 %v614, %v622
        %v624 = vpack.c.bf16 %v623, %v623
        %v626 = vunpack.c.l.b16 %v624
        %v627 = vpack.c.b16 %v626, %v626
        %628 = vrot.lane.b32.xlu0 %v627, 16
        %v629 = vpop.permute.xlu0 %628
        %vm631 = vcmask 257152
        %632 = vst.msk [vmem:[#allocation2] sm:$0xf] %vm631, %v629
        %633 = vrot.lane.b32.xlu0 %v391, 96
        %v634 = vpop.permute.xlu0 %633
        %635 = vrot.lane.b32.xlu0 %v391, 32
        %v636 = vpop.permute.xlu0 %635
        %v638 = vsel %vm401, %v634, 0
        %v641 = vsel %vm401, %v636, 0
        %643 = vmatprep.subr.bf16.mxu0 0
        %644 = vmatpush1.bf16.xpose.msra.mxu0 %v641
        %645 = vmatprep.subr.bf16.mxu0 0
        %646 = vmatpush1.bf16.xpose.msra.mxu0 0
        %647 = vmatprep.subr.bf16.mxu0 0
        %648 = vmatpush1.bf16.xpose.msra.mxu0 0
        %649 = vmatprep.subr.bf16.mxu0 0
        %650 = vmatpush1.bf16.xpose.msra.mxu0 0
        %651 = vmatprep.subr.bf16.mxu0 0
        %652 = vmatpush1.bf16.xpose.msra.mxu0 0
        %653 = vmatprep.subr.bf16.mxu0 0
        %654 = vmatpush1.bf16.xpose.msra.mxu0 0
        %655 = vmatprep.subr.bf16.mxu0 0
        %656 = vmatpush1.bf16.xpose.msra.mxu0 0
        %657 = vmatprep.subr.bf16.mxu0 0
        %658 = vmatpush1.bf16.xpose.msra.mxu0 0
        %659 = vmatprep.subr.bf16.mxu0 0
        %660 = vmatpush1.bf16.xpose.msra.mxu0 0
        %661 = vmatprep.subr.bf16.mxu0 0
        %662 = vmatpush1.bf16.xpose.msra.mxu0 0
        %663 = vmatprep.subr.bf16.mxu0 0
        %664 = vmatpush1.bf16.xpose.msra.mxu0 0
        %665 = vmatprep.subr.bf16.mxu0 0
        %666 = vmatpush1.bf16.xpose.msra.mxu0 0
        %667 = vmatprep.subr.bf16.mxu0 0
        %668 = vmatpush1.bf16.xpose.msra.mxu0 0
        %669 = vmatprep.subr.bf16.mxu0 0
        %670 = vmatpush1.bf16.xpose.msra.mxu0 0
        %671 = vmatprep.subr.bf16.mxu0 0
        %672 = vmatpush1.bf16.xpose.msra.mxu0 0
        %673 = vmatprep.subr.bf16.mxu0 0
        %674 = vmatpush1.bf16.xpose.msra.mxu0 0
        %675 = vmatprep.mubr.bf16.mxu0 0
        %676 = vmatmul.mubr.bf16.gmra.mrb[0].mxu0 %v638
        %v677 = vpop.f32.mrb[0].mxu0
        %v678 = vadd.f32 0.0, %v677
        %v679 = vpop.f32.mrb[0].mxu0
        %v680 = vpop.f32.mrb[0].mxu0
        %v681 = vpop.f32.mrb[0].mxu0
        %682 = vdwg.mxu0
        %v683 = vsel %vm397, -1e+09, %v678
        %v684 = vsel %vm449, %v683, -inf
        %685 = vmax.xlane.f32.xlu0 %v684
        %v686 = vpop.xlane.xlu0 %685
        %v687 = vsub.f32 %v683, %v686
        %v688 = vmul.f32 %v687, 1.442695
        %v689 = vpow.pop %v688
        %v690 = vpack.c.bf16 %v689, %v689
        %691 = vrot.lane.b32.xlu0 %v392, 96
        %v692 = vpop.permute.xlu0 %691
        %v694 = vsel %vm449, %v690, 0
        %v697 = vsel %vm460, %v692, 0
        %699 = vmatprep.subr.bf16.mxu0 0
        %700 = vmatpush1.bf16.msra.mxu0 %v697
        %701 = vmatprep.subr.bf16.mxu0 0
        %702 = vmatpush1.bf16.msra.mxu0 0
        %703 = vmatprep.subr.bf16.mxu0 0
        %704 = vmatpush1.bf16.msra.mxu0 0
        %705 = vmatprep.subr.bf16.mxu0 0
        %706 = vmatpush1.bf16.msra.mxu0 0
        %707 = vmatprep.subr.bf16.mxu0 0
        %708 = vmatpush1.bf16.msra.mxu0 0
        %709 = vmatprep.subr.bf16.mxu0 0
        %710 = vmatpush1.bf16.msra.mxu0 0
        %711 = vmatprep.subr.bf16.mxu0 0
        %712 = vmatpush1.bf16.msra.mxu0 0
        %713 = vmatprep.subr.bf16.mxu0 0
        %714 = vmatpush1.bf16.msra.mxu0 0
        %715 = vmatprep.subr.bf16.mxu0 0
        %716 = vmatpush1.bf16.msra.mxu0 0
        %717 = vmatprep.subr.bf16.mxu0 0
        %718 = vmatpush1.bf16.msra.mxu0 0
        %719 = vmatprep.subr.bf16.mxu0 0
        %720 = vmatpush1.bf16.msra.mxu0 0
        %721 = vmatprep.subr.bf16.mxu0 0
        %722 = vmatpush1.bf16.msra.mxu0 0
        %723 = vmatprep.subr.bf16.mxu0 0
        %724 = vmatpush1.bf16.msra.mxu0 0
        %725 = vmatprep.subr.bf16.mxu0 0
        %726 = vmatpush1.bf16.msra.mxu0 0
        %727 = vmatprep.subr.bf16.mxu0 0
        %728 = vmatpush1.bf16.msra.mxu0 0
        %729 = vmatprep.subr.bf16.mxu0 0
        %730 = vmatpush1.bf16.msra.mxu0 0
        %731 = vmatprep.mubr.bf16.mxu0 0
        %732 = vmatmul.mubr.bf16.gmra.mrb[0].mxu0 %v694
        %v733 = vpop.f32.mrb[0].mxu0
        %v734 = vadd.f32 0.0, %v733
        %v735 = vpop.f32.mrb[0].mxu0
        %v736 = vpop.f32.mrb[0].mxu0
        %v737 = vpop.f32.mrb[0].mxu0
        %738 = vdwg.mxu0
        %v739 = vsel %vm449, %v689, 0.0
        %740 = vadd.xlane.f32.xlu0 %v739
        %v741 = vpop.xlane.xlu0 %740
        %v742 = vrcp.pop %v741
        %v743 = vmul.f32 %v734, %v742
        %v744 = vpack.c.bf16 %v743, %v743
        %v746 = vunpack.c.l.b16 %v744
        %v747 = vpack.c.b16 %v746, %v746
        %748 = vrot.lane.b32.xlu0 %v747, 32
        %v749 = vpop.permute.xlu0 %748
        %vm751 = vcmask 388352
        %752 = vst.msk [vmem:[#allocation2] sm:$0xf] %vm751, %v749
        %753 = vrot.lane.b32.xlu0 %v391, 80
        %v754 = vpop.permute.xlu0 %753
        %755 = vrot.lane.b32.xlu0 %v391, 16
        %v756 = vpop.permute.xlu0 %755
        %v758 = vsel %vm401, %v754, 0
        %v761 = vsel %vm401, %v756, 0
        %763 = vmatprep.subr.bf16.mxu0 0
        %764 = vmatpush1.bf16.xpose.msra.mxu0 %v761
        %765 = vmatprep.subr.bf16.mxu0 0
        %766 = vmatpush1.bf16.xpose.msra.mxu0 0
        %767 = vmatprep.subr.bf16.mxu0 0
        %768 = vmatpush1.bf16.xpose.msra.mxu0 0
        %769 = vmatprep.subr.bf16.mxu0 0
        %770 = vmatpush1.bf16.xpose.msra.mxu0 0
        %771 = vmatprep.subr.bf16.mxu0 0
        %772 = vmatpush1.bf16.xpose.msra.mxu0 0
        %773 = vmatprep.subr.bf16.mxu0 0
        %774 = vmatpush1.bf16.xpose.msra.mxu0 0
        %775 = vmatprep.subr.bf16.mxu0 0
        %776 = vmatpush1.bf16.xpose.msra.mxu0 0
        %777 = vmatprep.subr.bf16.mxu0 0
        %778 = vmatpush1.bf16.xpose.msra.mxu0 0
        %779 = vmatprep.subr.bf16.mxu0 0
        %780 = vmatpush1.bf16.xpose.msra.mxu0 0
        %781 = vmatprep.subr.bf16.mxu0 0
        %782 = vmatpush1.bf16.xpose.msra.mxu0 0
        %783 = vmatprep.subr.bf16.mxu0 0
        %784 = vmatpush1.bf16.xpose.msra.mxu0 0
        %785 = vmatprep.subr.bf16.mxu0 0
        %786 = vmatpush1.bf16.xpose.msra.mxu0 0
        %787 = vmatprep.subr.bf16.mxu0 0
        %788 = vmatpush1.bf16.xpose.msra.mxu0 0
        %789 = vmatprep.subr.bf16.mxu0 0
        %790 = vmatpush1.bf16.xpose.msra.mxu0 0
        %791 = vmatprep.subr.bf16.mxu0 0
        %792 = vmatpush1.bf16.xpose.msra.mxu0 0
        %793 = vmatprep.subr.bf16.mxu0 0
        %794 = vmatpush1.bf16.xpose.msra.mxu0 0
        %795 = vmatprep.mubr.bf16.mxu0 0
        %796 = vmatmul.mubr.bf16.gmra.mrb[0].mxu0 %v758
        %v797 = vpop.f32.mrb[0].mxu0
        %v798 = vadd.f32 0.0, %v797
        %v799 = vpop.f32.mrb[0].mxu0
        %v800 = vpop.f32.mrb[0].mxu0
        %v801 = vpop.f32.mrb[0].mxu0
        %802 = vdwg.mxu0
        %v803 = vsel %vm397, -1e+09, %v798
        %v804 = vsel %vm449, %v803, -inf
        %805 = vmax.xlane.f32.xlu0 %v804
        %v806 = vpop.xlane.xlu0 %805
        %v807 = vsub.f32 %v803, %v806
        %v808 = vmul.f32 %v807, 1.442695
        %v809 = vpow.pop %v808
        %v810 = vpack.c.bf16 %v809, %v809
        %811 = vrot.lane.b32.xlu0 %v392, 80
        %v812 = vpop.permute.xlu0 %811
        %v814 = vsel %vm449, %v810, 0
        %v817 = vsel %vm460, %v812, 0
        %819 = vmatprep.subr.bf16.mxu0 0
        %820 = vmatpush1.bf16.msra.mxu0 %v817
        %821 = vmatprep.subr.bf16.mxu0 0
        %822 = vmatpush1.bf16.msra.mxu0 0
        %823 = vmatprep.subr.bf16.mxu0 0
        %824 = vmatpush1.bf16.msra.mxu0 0
        %825 = vmatprep.subr.bf16.mxu0 0
        %826 = vmatpush1.bf16.msra.mxu0 0
        %827 = vmatprep.subr.bf16.mxu0 0
        %828 = vmatpush1.bf16.msra.mxu0 0
        %829 = vmatprep.subr.bf16.mxu0 0
        %830 = vmatpush1.bf16.msra.mxu0 0
        %831 = vmatprep.subr.bf16.mxu0 0
        %832 = vmatpush1.bf16.msra.mxu0 0
        %833 = vmatprep.subr.bf16.mxu0 0
        %834 = vmatpush1.bf16.msra.mxu0 0
        %835 = vmatprep.subr.bf16.mxu0 0
        %836 = vmatpush1.bf16.msra.mxu0 0
        %837 = vmatprep.subr.bf16.mxu0 0
        %838 = vmatpush1.bf16.msra.mxu0 0
        %839 = vmatprep.subr.bf16.mxu0 0
        %840 = vmatpush1.bf16.msra.mxu0 0
        %841 = vmatprep.subr.bf16.mxu0 0
        %842 = vmatpush1.bf16.msra.mxu0 0
        %843 = vmatprep.subr.bf16.mxu0 0
        %844 = vmatpush1.bf16.msra.mxu0 0
        %845 = vmatprep.subr.bf16.mxu0 0
        %846 = vmatpush1.bf16.msra.mxu0 0
        %847 = vmatprep.subr.bf16.mxu0 0
        %848 = vmatpush1.bf16.msra.mxu0 0
        %849 = vmatprep.subr.bf16.mxu0 0
        %850 = vmatpush1.bf16.msra.mxu0 0
        %851 = vmatprep.mubr.bf16.mxu0 0
        %852 = vmatmul.mubr.bf16.gmra.mrb[0].mxu0 %v814
        %v853 = vpop.f32.mrb[0].mxu0
        %v854 = vadd.f32 0.0, %v853
        %v855 = vpop.f32.mrb[0].mxu0
        %v856 = vpop.f32.mrb[0].mxu0
        %v857 = vpop.f32.mrb[0].mxu0
        %858 = vdwg.mxu0
        %v859 = vsel %vm449, %v809, 0.0
        %860 = vadd.xlane.f32.xlu0 %v859
        %v861 = vpop.xlane.xlu0 %860
        %v862 = vrcp.pop %v861
        %v863 = vmul.f32 %v854, %v862
        %v864 = vpack.c.bf16 %v863, %v863
        %v866 = vunpack.c.l.b16 %v864
        %v867 = vpack.c.b16 %v866, %v866
        %868 = vrot.lane.b32.xlu0 %v867, 48
        %v869 = vpop.permute.xlu0 %868
        %vm871 = vcmask 519552
        %872 = vst.msk [vmem:[#allocation2] sm:$0xf] %vm871, %v869
        %v873 = vld [vmem:[#allocation2] sm:$0xf]
        %v874 = vld [vmem:[#allocation8] sm:$0xf]
        %v875 = vld [vmem:[#allocation8 + $0x4] sm:$0xf]
        %v876 = vld [vmem:[#allocation8 + $0x8] sm:$0xf]
        %v877 = vld [vmem:[#allocation8 + $0xc] sm:$0xf]
        %v878 = vld [vmem:[#allocation8 + $0x10] sm:$0xf]
        %v879 = vld [vmem:[#allocation8 + $0x14] sm:$0xf]
        %v880 = vld [vmem:[#allocation8 + $0x18] sm:$0xf]
        %v881 = vld [vmem:[#allocation8 + $0x1c] sm:$0xf]
        %v882 = vld [vmem:[%s4] sm:$0x1]
        %v884 = vlaneseq
        %v885 = vshrl.u32 %v884, 7
        %v886 = vsub.s32 0, %v885
        %v887 = vrot.slane %v882, %v886
        %v897 = vunpack.c.l.b16 %v874
        %v898 = vunpack.c.l.b16 %v875
        %v899 = vunpack.c.l.b16 %v876
        %v900 = vunpack.c.l.b16 %v877
        %v901 = vunpack.c.l.b16 %v878
        %v902 = vunpack.c.l.b16 %v879
        %v903 = vunpack.c.l.b16 %v880
        %v904 = vunpack.c.l.b16 %v881
        %v905 = vpack.c.b16 %v898, %v897
        %v906 = vpack.c.b16 %v900, %v899
        %v907 = vpack.c.b16 %v902, %v901
        %v908 = vpack.c.b16 %v904, %v903
        %v914 = vsel %vm271, %v873, 0
        %916 = vmatprep.subr.bf16.mxu0 0
        %917 = vmatpush1.bf16.msra.mxu0 %v905
        %918 = vmatprep.subr.bf16.mxu0 0
        %919 = vmatpush1.bf16.msra.mxu0 %v906
        %920 = vmatprep.subr.bf16.mxu0 0
        %921 = vmatpush1.bf16.msra.mxu0 %v907
        %922 = vmatprep.subr.bf16.mxu0 0
        %923 = vmatpush1.bf16.msra.mxu0 %v908
        %924 = vmatprep.subr.bf16.mxu0 0
        %925 = vmatpush1.bf16.msra.mxu0 0
        %926 = vmatprep.subr.bf16.mxu0 0
        %927 = vmatpush1.bf16.msra.mxu0 0
        %928 = vmatprep.subr.bf16.mxu0 0
        %929 = vmatpush1.bf16.msra.mxu0 0
        %930 = vmatprep.subr.bf16.mxu0 0
        %931 = vmatpush1.bf16.msra.mxu0 0
        %932 = vmatprep.subr.bf16.mxu0 0
        %933 = vmatpush1.bf16.msra.mxu0 0
        %934 = vmatprep.subr.bf16.mxu0 0
        %935 = vmatpush1.bf16.msra.mxu0 0
        %936 = vmatprep.subr.bf16.mxu0 0
        %937 = vmatpush1.bf16.msra.mxu0 0
        %938 = vmatprep.subr.bf16.mxu0 0
        %939 = vmatpush1.bf16.msra.mxu0 0
        %940 = vmatprep.subr.bf16.mxu0 0
        %941 = vmatpush1.bf16.msra.mxu0 0
        %942 = vmatprep.subr.bf16.mxu0 0
        %943 = vmatpush1.bf16.msra.mxu0 0
        %944 = vmatprep.subr.bf16.mxu0 0
        %945 = vmatpush1.bf16.msra.mxu0 0
        %946 = vmatprep.subr.bf16.mxu0 0
        %947 = vmatpush1.bf16.msra.mxu0 0
        %948 = vmatprep.mubr.bf16.mxu0 0
        %949 = vmatmul.mubr.bf16.gmra.mrb[0].mxu0 %v914
        %v950 = vpop.f32.mrb[0].mxu0
        %v951 = vadd.f32 %v887, %v950
        %v952 = vpop.f32.mrb[0].mxu0
        %v953 = vpop.f32.mrb[0].mxu0
        %v954 = vpop.f32.mrb[0].mxu0
        %955 = vdwg.mxu0
        %v956 = vadd.f32 %v951, %v270
        %957 = vst.msk [vmem:[%s268] sm:$0xff] %vm271, %v956
        %s958 = sand.u32 %s141, 1
        %s959 = scalar_lea.sflag [#allocation5], %s958
        %s960 = sand.u32 %s141, 1
        %s961 = smul.addr %s960, 8
        %s962 = scalar_lea.vmem [#allocation9], %s961
        // Predicated region
        $region53: #{tpu_custom_call.1} parent=39 // pred_check
          %p963 = pneg %p151
        $region54: #{tpu_custom_call.1} parent=39 // pred_check_branch
          %965 = sbr.rel (%p963) target = $region56
        $region55: #{tpu_custom_call.1} parent=39 // pred_region
          %s967 = ssub.s32 128, 128
          %968 = vsyncadd %s959, %s967
          %s969 = smul.addr %s23, 128
          %s970 = scalar_lea.hbm %s5, %s969
          %s972 = sshll.u32 %s962, 4
          %s973 = int_to_ptr.vmem [resolvable:$true] %s972
          %975 = dma.vmem_to_hbm [thread:$0]  %s973, 128, %s970, %s959
        $region56: #{tpu_custom_call.1} parent=39 // pred_fallthru
          _
      $region40: #{tpu_custom_call.1} parent=5 // pred_fallthru
        _
      %p976 = scmp.le.s32.totalorder 2, %s18
      // Predicated region
      $region57: #{tpu_custom_call.1} parent=5 // pred_check
        %p977 = pneg %p976
      $region58: #{tpu_custom_call.1} parent=5 // pred_check_branch
        %979 = sbr.rel (%p977) target = $region60
      $region59: #{tpu_custom_call.1} parent=5 // pred_region
        %s980 = ssub.s32 %s18, 2
        // Predicated region
        $region61: #{tpu_custom_call.1} parent=59 // pred_check
          %p981 = pneg %p157
        $region62: #{tpu_custom_call.1} parent=59 // pred_check_branch
          %983 = sbr.rel (%p981) target = $region64
        $region63: #{tpu_custom_call.1} parent=59 // pred_region
          %s984 = sand.u32 %s142, 1
          %s985 = scalar_lea.sflag [#allocation5], %s984
          %s986 = sand.u32 %s142, 1
          %s987 = smul.addr %s986, 8
          %s988 = scalar_lea.vmem [#allocation9], %s987
          %989 = dma.done %s985, 128
        $region64: #{tpu_custom_call.1} parent=59 // pred_fallthru
          _
      $region60: #{tpu_custom_call.1} parent=5 // pred_fallthru
        _
    $region6: #{tpu_custom_call.1} parent=1 // loop_footer
      %s22 = sadd.s32 1, %s18
    $region7: #{tpu_custom_call.1} parent=1 // loop_footer_branch
      %17 = sbr.rel target = $region3
    $region8: #{tpu_custom_call.1} parent=1 // loop_exit
      _
    %990 = vsyncpa [#allocation4], 1
    %s991 = scalar_lea.sflag [#allocation4], 1
    %992 = vsyncpa %s991, 1
    %993 = vsyncpa [#allocation7], 1
    %994 = vsyncpa [#allocation5], 1
    %s995 = scalar_lea.sflag [#allocation5], 1
    %996 = vsyncpa %s995, 1

</llo_original>
